<compile_context>
chip_gen: v7x
topology: tpu7x:2x2x1
jax: 0.10.0
libtpu: 0.0.40
codegen_flags: <defaults>
</compile_context>

<pallas_src>
import math

import numpy as np
import jax
import jax.numpy as jnp
from jax.experimental import pallas as pl
from jax.experimental.pallas import tpu as pltpu


def _position_encoding_kernel(f_ref, x_ref, o_ref):
    # f_ref: (L, 1) frequency column, x_ref: (1, TK) flattened coords on lanes,
    # o_ref: (2, L, TK) -> [sin slab, cos slab].
    L, _ = f_ref.shape
    _, TK = x_ref.shape
    x = x_ref[...].astype(jnp.float32)                 # (1, TK)
    f = f_ref[...].astype(jnp.float32)                 # (L, 1)
    xb = jnp.broadcast_to(x, (L, TK))                  # sublane broadcast (cheap)
    fb = jnp.broadcast_to(f, (L, TK))                  # lane broadcast (cheap)
    arg = fb * xb                                      # one dense f32 VPU multiply
    o_ref[0, :, :] = jnp.sin(arg).astype(o_ref.dtype)  # one dense transcendental stream
    o_ref[1, :, :] = jnp.cos(arg).astype(o_ref.dtype)  # one dense transcendental stream


def make_position_encoding(L: int = 10, lane_tile: int = 16384):
    """Returns (position_encoding_fn, freqs). lane_tile must be a multiple of 128."""
    assert lane_tile % 128 == 0
    # "Parameters": frequency bands PI * 2**arange(-1, L-1), as in the module.
    freqs = (math.pi * (2.0 ** np.arange(-1, L - 1))).astype(np.float32)

    def position_encoding(x):
        RN, SN, Dim = x.shape
        N = RN * SN
        K = N * Dim                      # total flattened coordinate count
        out_feat = 2 * L * Dim

        # Lane extent: round up to 128, then to a multiple of the lane tile.
        k_round = ((K + 127) // 128) * 128
        TK = k_round if k_round <= lane_tile else lane_tile
        K_pad = ((K + TK - 1) // TK) * TK
        grid = (K_pad // TK,)

        # (RN, SN, Dim) -> (1, K) is a free reshape of a contiguous array.
        x_flat = x.reshape(1, K)
        if K_pad != K:
            x_flat = jnp.pad(x_flat, ((0, 0), (0, K_pad - K)))

        freq_col = jnp.asarray(freqs).reshape(L, 1)

        out_k = pl.pallas_call(
            _position_encoding_kernel,
            out_shape=jax.ShapeDtypeStruct((2, L, K_pad), x.dtype),
            grid=grid,
            in_specs=[
                pl.BlockSpec((L, 1), lambda i: (0, 0)),      # frequency column
                pl.BlockSpec((1, TK), lambda i: (0, i)),     # coords on lanes
            ],
            out_specs=pl.BlockSpec((2, L, TK), lambda i: (0, 0, i)),
            compiler_params=pltpu.CompilerParams(
                dimension_semantics=("parallel",),           # v7x: shard across both TCs
            ),
        )(freq_col, x_flat)

        # Layout plumbing back to the reference feature order:
        # out_k[s, l, n*Dim + d]  ->  out[n, l*2*Dim + s*Dim + d]
        out = out_k[:, :, :K].reshape(2, L, N, Dim)
        out = jnp.transpose(out, (2, 1, 0, 3)).reshape(N, out_feat)
        return out

    return position_encoding, freqs


def reference_position_encoding(x, freqs):
    # Pure-JAX reference mirroring the PyTorch semantics.
    RN, SN, Dim = x.shape
    Lf = freqs.shape[0]
    aug = jnp.asarray(freqs).reshape(Lf, 1, 1, 1)
    xb = x[None]                                    # (1, RN, SN, Dim)
    sin_term = jnp.sin(aug * xb)                    # (L, RN, SN, Dim)
    cos_term = jnp.cos(aug * xb)
    sc = jnp.stack([sin_term, cos_term])            # (2, L, RN, SN, Dim)
    # 'Num2 L RN SN Dim -> (RN SN) (L Num2 Dim)'
    sc = jnp.transpose(sc, (2, 3, 1, 0, 4))         # (RN, SN, L, 2, Dim)
    return sc.reshape(RN * SN, Lf * 2 * Dim)


if __name__ == "__main__":
    L = 10
    RN, SN, Dim = 4, 16, 3                          # small ray/sample/coord shapes
    key = jax.random.PRNGKey(0)
    # Coordinates in [-1, 1] (typical normalized positions for this encoding).
    x = jax.random.uniform(key, (RN, SN, Dim), dtype=jnp.float32,
                           minval=-1.0, maxval=1.0)

    pe_fn, freqs = make_position_encoding(L)
    out = jax.block_until_ready(pe_fn(x))

    ref = reference_position_encoding(x, freqs)
    assert out.shape == (RN * SN, 2 * L * Dim), out.shape
    # Tolerance covers f32 argument-rounding amplification by the highest
    # frequency band (pi * 2**8) in sin/cos; values themselves are in [-1, 1].
    np.testing.assert_allclose(np.asarray(out), np.asarray(ref),
                               rtol=1e-3, atol=1e-3)
    print("KERNEL_OK")
</pallas_src>

<mosaic_0001>
module attributes {stable_mosaic.version = 11 : i64} {
  func.func @_position_encoding_kernel(%arg0: i32, %arg1: memref<10x1xf32, #tpu.memory_space<vmem>>, %arg2: memref<1x256xf32, #tpu.memory_space<vmem>>, %arg3: memref<2x10x256xf32, #tpu.memory_space<vmem>>) attributes {dimension_semantics = [#tpu.dimension_semantics<parallel>], iteration_bounds = array<i64: 1>, scalar_prefetch = 0 : i64, scratch_operands = 0 : i64, tpu.core_type = #tpu.core_type<tc>, window_params = [{pipeline_mode = #tpu.pipeline_mode<synchronous>, transform_indices = @transform_0, window_bounds = array<i64: 10, 1>}, {transform_indices = @transform_1, window_bounds = array<i64: 1, 256>}, {transform_indices = @transform_2, window_bounds = array<i64: 2, 10, 256>}]} {
    %c0 = arith.constant 0 : index
    %c0_0 = arith.constant 0 : index
    %0 = vector.load %arg2[%c0, %c0_0] : memref<1x256xf32, #tpu.memory_space<vmem>>, vector<1x256xf32>
    %c0_1 = arith.constant 0 : index
    %c0_2 = arith.constant 0 : index
    %1 = vector.load %arg1[%c0_1, %c0_2] : memref<10x1xf32, #tpu.memory_space<vmem>>, vector<10x1xf32>
    %2 = vector.shape_cast %0 : vector<1x256xf32> to vector<1x256xf32>
    %3 = vector.broadcast %2 : vector<1x256xf32> to vector<10x256xf32>
    %4 = vector.shape_cast %1 : vector<10x1xf32> to vector<10x1xf32>
    %5 = vector.broadcast %4 : vector<10x1xf32> to vector<10x256xf32>
    %6 = arith.mulf %5, %3 : vector<10x256xf32>
    %7 = math.sin %6 : vector<10x256xf32>
    %c0_3 = arith.constant 0 : index
    %c0_4 = arith.constant 0 : index
    %c0_5 = arith.constant 0 : index
    %8 = vector.load %arg3[%c0_3, %c0_4, %c0_5] : memref<2x10x256xf32, #tpu.memory_space<vmem>>, vector<1x10x256xf32>
    %9 = vector.shape_cast %8 : vector<1x10x256xf32> to vector<10x256xf32>
    %10 = vector.shape_cast %7 : vector<10x256xf32> to vector<1x10x256xf32>
    tpu.vector_store %arg3[%c0_3, %c0_4, %c0_5], %10 {strides = array<i32>} : memref<2x10x256xf32, #tpu.memory_space<vmem>>, vector<1x10x256xf32>,
    %11 = math.cos %6 : vector<10x256xf32>
    %c1 = arith.constant 1 : index
    %c0_6 = arith.constant 0 : index
    %c0_7 = arith.constant 0 : index
    %12 = vector.load %arg3[%c1, %c0_6, %c0_7] : memref<2x10x256xf32, #tpu.memory_space<vmem>>, vector<1x10x256xf32>
    %13 = vector.shape_cast %12 : vector<1x10x256xf32> to vector<10x256xf32>
    %14 = vector.shape_cast %11 : vector<10x256xf32> to vector<1x10x256xf32>
    tpu.vector_store %arg3[%c1, %c0_6, %c0_7], %14 {strides = array<i32>} : memref<2x10x256xf32, #tpu.memory_space<vmem>>, vector<1x10x256xf32>,
    return
  }
  func.func @transform_0(%arg0: i32) -> (i32, i32) {
    %c0_i32 = arith.constant 0 : i32
    %c0_i32_0 = arith.constant 0 : i32
    %c0_i32_1 = arith.constant 0 : i32
    return %c0_i32, %c0_i32_0 : i32, i32
  }
  func.func @transform_1(%arg0: i32) -> (i32, i32) {
    %c0_i32 = arith.constant 0 : i32
    %c0_i32_0 = arith.constant 0 : i32
    return %c0_i32, %arg0 : i32, i32
  }
  func.func @transform_2(%arg0: i32) -> (i32, i32, i32) {
    %c0_i32 = arith.constant 0 : i32
    %c0_i32_0 = arith.constant 0 : i32
    %c0_i32_1 = arith.constant 0 : i32
    return %c0_i32, %c0_i32_0, %arg0 : i32, i32, i32
  }
}

</mosaic_0001>

<llo_original>
// kernel: tpu_custom_call.1
$region0: #{tpu_custom_call.1}
  #allocation0 [shape = 'u32[]', space=smem, size = 0x4, offset = 0x4, fixed_abs, tag = 'smem constant byte address 0x4 - core index']
  #allocation1 [shape = 'u32[144,128]{1,0:T(1,128)}', space=vmem, size = 0x12000, scoped, tag = 'internal scratch']
  %s0 = inlined_call_operand.vmem [shape: f32[10,1], index: 0, kind: input, shape index: {}]
  %s1 = inlined_call_operand.vmem [shape: f32[1,256], index: 1, kind: input, shape index: {}]
  %s2 = inlined_call_operand.vmem [shape: f32[2,10,256], index: 2, kind: output, shape index: {}]
  %s3 = sld [smem:[#allocation0]]
  $region18: #{tpu_custom_call.1} parent=0
    _
  %s5 = ssub.s32 1, %s3
  %s6 = scalar_select 0, %s5, %s3
  // Predicated region
  $region2: #{tpu_custom_call.1} parent=0 // pred_check
    _
  $region3: #{tpu_custom_call.1} parent=0 // pred_check_branch
    %8 = sbr.rel (0) target = $region5
  $region4: #{tpu_custom_call.1} parent=0 // pred_region
    _
  $region5: #{tpu_custom_call.1} parent=0 // pred_fallthru
    _
  // Predicated region
  $region6: #{tpu_custom_call.1} parent=0 // pred_check
    _
  $region7: #{tpu_custom_call.1} parent=0 // pred_check_branch
    %10 = sbr.rel (0) target = $region9
  $region8: #{tpu_custom_call.1} parent=0 // pred_region
    _
  $region9: #{tpu_custom_call.1} parent=0 // pred_fallthru
    _
  %v11 = vld [vmem:[%s1] sm:$0x3]
  %v12 = vld [vmem:[%s0] sm:$0xff]
  %v13 = vld [vmem:[%s0 + $0x8] sm:$0x3]
  %v15 = vlaneseq
  %v16 = vshrl.u32 %v15, 7
  %v17 = vsub.s32 0, %v16
  %v18 = vrot.slane %v11, %v17
  %v19 = vlaneseq
  %v20 = vshrl.u32 %v19, 7
  %v21 = vsub.s32 1, %v20
  %v22 = vrot.slane %v11, %v21
  %26 = vset.pattern.permute.xlu0 0
  %27 = vperm.xlu0 %26, %v12
  %v28 = vpop.permute.xlu0 %27
  %31 = vset.pattern.permute.xlu0 0
  %32 = vperm.xlu0 %31, %v13
  %v33 = vpop.permute.xlu0 %32
  %v35 = vmul.f32 %v28, %v18
  %v36 = vmul.f32 %v28, %v22
  %v37 = vmul.f32 %v33, %v18
  %v38 = vmul.f32 %v33, %v22
  %v39 = vand.u32 2147483647, %v35
  %vm40 = vcmp.le.f32.partialorder %v39, 0.7853982
  %vm41 = vcmp.lt.s32.totalorder %v35, 0
  %v42 = vand.u32 %v35, 2139095040
  %v43 = vshrl.u32 %v42, 23
  %v44 = vsub.s32 %v43, 127
  %v45 = vand.u32 2147483647, %v35
  %v46 = vand.u32 %v45, 8388607
  %v47 = vor.u32 %v46, 8388608
  %v48 = vsub.s32 0, %v47
  %v49 = vadd.s32 %v44, 1
  %vm50 = vcmp.gt.s32.totalorder %v49, 0
  %v51 = vsel %vm50, %v49, 0
  %v52 = vshrl.u32 %v51, 5
  %v53 = vand.u32 %v51, 31
  %v54 = vsub.s32 32, %v53
  %v55 = vshrl.u32 683565275, %v54
  %v56 = vshll.u32 683565275, %v53
  %v57 = vshrl.u32 2475754826, %v54
  %v58 = vor.u32 %v56, %v57
  %v59 = vshll.u32 2475754826, %v53
  %v60 = vshrl.u32 2131351028, %v54
  %v61 = vor.u32 %v59, %v60
  %v62 = vshll.u32 2131351028, %v53
  %v63 = vshrl.u32 2102212464, %v54
  %v64 = vor.u32 %v62, %v63
  %v65 = vshll.u32 2102212464, %v53
  %v66 = vshrl.u32 920167782, %v54
  %v67 = vor.u32 %v65, %v66
  %v68 = vshll.u32 920167782, %v53
  %v69 = vshrl.u32 1326507024, %v54
  %v70 = vor.u32 %v68, %v69
  %vm71 = vcmp.lt.s32.totalorder %v52, 1
  %vm72 = vcmp.lt.s32.totalorder %v52, 2
  %vm73 = vcmp.lt.s32.totalorder %v52, 3
  %vm74 = vcmp.lt.s32.totalorder %v52, 4
  %v75 = vsel %vm71, %v55, %v58
  %v76 = vsel %vm74, %v64, 2102212464
  %v77 = vsel %vm73, %v61, %v76
  %v78 = vsel %vm72, %v75, %v77
  %v79 = vsel %vm71, %v58, %v61
  %v80 = vsel %vm74, %v67, 920167782
  %v81 = vsel %vm73, %v64, %v80
  %v82 = vsel %vm72, %v79, %v81
  %v83 = vsel %vm71, %v61, %v64
  %v84 = vsel %vm74, %v70, 1326507024
  %v85 = vsel %vm73, %v67, %v84
  %v86 = vsel %vm72, %v83, %v85
  %v87 = vshll.u32 %v47, 8
  %v88 = vmul.u32.u64.compose %v87, %v86
  %v89 = vextract.low.u32 %v88
  %v90 = vextract.high.u32 %v88
  %v91 = vmul.u32.u64.compose %v87, %v82
  %v92 = vextract.low.u32 %v91
  %v93 = vextract.high.u32 %v91
  %v94 = vmul.u32 %v87, %v78
  %v95 = vadd.s32 %v90, %v92
  %vm96 = vc.u32 %v90, %v92
  %v97 = vadd.s32 %v93, 1
  %v98 = vsel %vm96, %v97, %v93
  %v99 = vadd.s32 %v94, %v98
  %v100 = vadd.s32 %v99, 536870912
  %v101 = vshrl.u32 %v100, 30
  %v102 = vshll.u32 %v101, 30
  %v103 = vsub.s32 %v99, %v102
  %vm104 = vcmp.lt.s32.totalorder %v103, 0
  %v105 = vsub.s32 0, %v103
  %v106 = vsel %vm104, %v105, %v103
  %v107 = vclz %v106
  %v108 = vsub.s32 %v107, 2
  %vm109 = vcmp.gt.s32.totalorder 0, %v108
  %v110 = vsel %vm109, 0, %v108
  %v111 = vsub.s32 32, %v110
  %v112 = vshll.u32 %v103, %v110
  %v113 = vshrl.u32 %v95, %v111
  %v114 = vor.u32 %v112, %v113
  %v115 = vsub.s32 4294967266, %v110
  %v116 = vadd.s32 %v115, 127
  %v117 = vshll.u32 %v116, 23
  %v118 = vor.u32 4788187, %v117
  %v119 = vand.u32 2147483647, %v118
  %v121 = vcvt.s32.f32 %v114
  %v122 = vmul.f32 %v121, %v119
  %v123 = vxor.u32 %v122, 2147483648
  %v124 = vsel %vm41, %v123, %v122
  %v125 = vsub.s32 4, %v101
  %v126 = vsel %vm41, %v125, %v101
  %v127 = vsel %vm40, %v35, %v124
  %v128 = vsel %vm40, 0, %v126
  %v129 = vcosq.f32.pop %v127
  %v130 = vsinq.f32.pop %v127
  %vm131 = vweird.f32 %v35
  %v132 = vadd.s32 %v128, 3
  %v133 = vand.u32 %v132, 3
  %vm134 = vcmp.lt.s32.totalorder %v133, 2
  %vm135 = vcmp.eq.s32.totalorder %v133, 0
  %v136 = vxor.u32 %v130, 2147483648
  %v137 = vsel %vm135, %v129, %v136
  %vm138 = vcmp.eq.s32.totalorder %v133, 2
  %v139 = vxor.u32 %v129, 2147483648
  %v140 = vsel %vm138, %v139, %v130
  %v141 = vsel %vm134, %v137, %v140
  %v142 = vsel %vm131, nan, %v141
  %v143 = vand.u32 2147483647, %v36
  %vm144 = vcmp.le.f32.partialorder %v143, 0.7853982
  %vm145 = vcmp.lt.s32.totalorder %v36, 0
  %v146 = vand.u32 %v36, 2139095040
  %v147 = vshrl.u32 %v146, 23
  %v148 = vsub.s32 %v147, 127
  %v149 = vand.u32 2147483647, %v36
  %v150 = vand.u32 %v149, 8388607
  %v151 = vor.u32 %v150, 8388608
  %v152 = vsub.s32 0, %v151
  %v153 = vadd.s32 %v148, 1
  %vm154 = vcmp.gt.s32.totalorder %v153, 0
  %v155 = vsel %vm154, %v153, 0
  %v156 = vshrl.u32 %v155, 5
  %v157 = vand.u32 %v155, 31
  %v158 = vsub.s32 32, %v157
  %v159 = vshrl.u32 683565275, %v158
  %v160 = vshll.u32 683565275, %v157
  %v161 = vshrl.u32 2475754826, %v158
  %v162 = vor.u32 %v160, %v161
  %v163 = vshll.u32 2475754826, %v157
  %v164 = vshrl.u32 2131351028, %v158
  %v165 = vor.u32 %v163, %v164
  %v166 = vshll.u32 2131351028, %v157
  %v167 = vshrl.u32 2102212464, %v158
  %v168 = vor.u32 %v166, %v167
  %v169 = vshll.u32 2102212464, %v157
  %v170 = vshrl.u32 920167782, %v158
  %v171 = vor.u32 %v169, %v170
  %v172 = vshll.u32 920167782, %v157
  %v173 = vshrl.u32 1326507024, %v158
  %v174 = vor.u32 %v172, %v173
  %vm175 = vcmp.lt.s32.totalorder %v156, 1
  %vm176 = vcmp.lt.s32.totalorder %v156, 2
  %vm177 = vcmp.lt.s32.totalorder %v156, 3
  %vm178 = vcmp.lt.s32.totalorder %v156, 4
  %v179 = vsel %vm175, %v159, %v162
  %v180 = vsel %vm178, %v168, 2102212464
  %v181 = vsel %vm177, %v165, %v180
  %v182 = vsel %vm176, %v179, %v181
  %v183 = vsel %vm175, %v162, %v165
  %v184 = vsel %vm178, %v171, 920167782
  %v185 = vsel %vm177, %v168, %v184
  %v186 = vsel %vm176, %v183, %v185
  %v187 = vsel %vm175, %v165, %v168
  %v188 = vsel %vm178, %v174, 1326507024
  %v189 = vsel %vm177, %v171, %v188
  %v190 = vsel %vm176, %v187, %v189
  %v191 = vshll.u32 %v151, 8
  %v192 = vmul.u32.u64.compose %v191, %v190
  %v193 = vextract.low.u32 %v192
  %v194 = vextract.high.u32 %v192
  %v195 = vmul.u32.u64.compose %v191, %v186
  %v196 = vextract.low.u32 %v195
  %v197 = vextract.high.u32 %v195
  %v198 = vmul.u32 %v191, %v182
  %v199 = vadd.s32 %v194, %v196
  %vm200 = vc.u32 %v194, %v196
  %v201 = vadd.s32 %v197, 1
  %v202 = vsel %vm200, %v201, %v197
  %v203 = vadd.s32 %v198, %v202
  %v204 = vadd.s32 %v203, 536870912
  %v205 = vshrl.u32 %v204, 30
  %v206 = vshll.u32 %v205, 30
  %v207 = vsub.s32 %v203, %v206
  %vm208 = vcmp.lt.s32.totalorder %v207, 0
  %v209 = vsub.s32 0, %v207
  %v210 = vsel %vm208, %v209, %v207
  %v211 = vclz %v210
  %v212 = vsub.s32 %v211, 2
  %vm213 = vcmp.gt.s32.totalorder 0, %v212
  %v214 = vsel %vm213, 0, %v212
  %v215 = vsub.s32 32, %v214
  %v216 = vshll.u32 %v207, %v214
  %v217 = vshrl.u32 %v199, %v215
  %v218 = vor.u32 %v216, %v217
  %v219 = vsub.s32 4294967266, %v214
  %v220 = vadd.s32 %v219, 127
  %v221 = vshll.u32 %v220, 23
  %v222 = vor.u32 4788187, %v221
  %v223 = vand.u32 2147483647, %v222
  %v225 = vcvt.s32.f32 %v218
  %v226 = vmul.f32 %v225, %v223
  %v227 = vxor.u32 %v226, 2147483648
  %v228 = vsel %vm145, %v227, %v226
  %v229 = vsub.s32 4, %v205
  %v230 = vsel %vm145, %v229, %v205
  %v231 = vsel %vm144, %v36, %v228
  %v232 = vsel %vm144, 0, %v230
  %v233 = vcosq.f32.pop %v231
  %v234 = vsinq.f32.pop %v231
  %vm235 = vweird.f32 %v36
  %v236 = vadd.s32 %v232, 3
  %v237 = vand.u32 %v236, 3
  %vm238 = vcmp.lt.s32.totalorder %v237, 2
  %vm239 = vcmp.eq.s32.totalorder %v237, 0
  %v240 = vxor.u32 %v234, 2147483648
  %v241 = vsel %vm239, %v233, %v240
  %vm242 = vcmp.eq.s32.totalorder %v237, 2
  %v243 = vxor.u32 %v233, 2147483648
  %v244 = vsel %vm242, %v243, %v234
  %v245 = vsel %vm238, %v241, %v244
  %v246 = vsel %vm235, nan, %v245
  %v247 = vand.u32 2147483647, %v37
  %vm248 = vcmp.le.f32.partialorder %v247, 0.7853982
  %vm249 = vcmp.lt.s32.totalorder %v37, 0
  %v250 = vand.u32 %v37, 2139095040
  %v251 = vshrl.u32 %v250, 23
  %v252 = vsub.s32 %v251, 127
  %v253 = vand.u32 2147483647, %v37
  %v254 = vand.u32 %v253, 8388607
  %v255 = vor.u32 %v254, 8388608
  %v256 = vsub.s32 0, %v255
  %v257 = vadd.s32 %v252, 1
  %vm258 = vcmp.gt.s32.totalorder %v257, 0
  %v259 = vsel %vm258, %v257, 0
  %v260 = vshrl.u32 %v259, 5
  %v261 = vand.u32 %v259, 31
  %v262 = vsub.s32 32, %v261
  %v263 = vshrl.u32 683565275, %v262
  %v264 = vshll.u32 683565275, %v261
  %v265 = vshrl.u32 2475754826, %v262
  %v266 = vor.u32 %v264, %v265
  %v267 = vshll.u32 2475754826, %v261
  %v268 = vshrl.u32 2131351028, %v262
  %v269 = vor.u32 %v267, %v268
  %v270 = vshll.u32 2131351028, %v261
  %v271 = vshrl.u32 2102212464, %v262
  %v272 = vor.u32 %v270, %v271
  %v273 = vshll.u32 2102212464, %v261
  %v274 = vshrl.u32 920167782, %v262
  %v275 = vor.u32 %v273, %v274
  %v276 = vshll.u32 920167782, %v261
  %v277 = vshrl.u32 1326507024, %v262
  %v278 = vor.u32 %v276, %v277
  %vm279 = vcmp.lt.s32.totalorder %v260, 1
  %vm280 = vcmp.lt.s32.totalorder %v260, 2
  %vm281 = vcmp.lt.s32.totalorder %v260, 3
  %vm282 = vcmp.lt.s32.totalorder %v260, 4
  %v283 = vsel %vm279, %v263, %v266
  %v284 = vsel %vm282, %v272, 2102212464
  %v285 = vsel %vm281, %v269, %v284
  %v286 = vsel %vm280, %v283, %v285
  %v287 = vsel %vm279, %v266, %v269
  %v288 = vsel %vm282, %v275, 920167782
  %v289 = vsel %vm281, %v272, %v288
  %v290 = vsel %vm280, %v287, %v289
  %v291 = vsel %vm279, %v269, %v272
  %v292 = vsel %vm282, %v278, 1326507024
  %v293 = vsel %vm281, %v275, %v292
  %v294 = vsel %vm280, %v291, %v293
  %v295 = vshll.u32 %v255, 8
  %v296 = vmul.u32.u64.compose %v295, %v294
  %v297 = vextract.low.u32 %v296
  %v298 = vextract.high.u32 %v296
  %v299 = vmul.u32.u64.compose %v295, %v290
  %v300 = vextract.low.u32 %v299
  %v301 = vextract.high.u32 %v299
  %v302 = vmul.u32 %v295, %v286
  %v303 = vadd.s32 %v298, %v300
  %vm304 = vc.u32 %v298, %v300
  %v305 = vadd.s32 %v301, 1
  %v306 = vsel %vm304, %v305, %v301
  %v307 = vadd.s32 %v302, %v306
  %v308 = vadd.s32 %v307, 536870912
  %v309 = vshrl.u32 %v308, 30
  %v310 = vshll.u32 %v309, 30
  %v311 = vsub.s32 %v307, %v310
  %vm312 = vcmp.lt.s32.totalorder %v311, 0
  %v313 = vsub.s32 0, %v311
  %v314 = vsel %vm312, %v313, %v311
  %v315 = vclz %v314
  %v316 = vsub.s32 %v315, 2
  %vm317 = vcmp.gt.s32.totalorder 0, %v316
  %v318 = vsel %vm317, 0, %v316
  %v319 = vsub.s32 32, %v318
  %v320 = vshll.u32 %v311, %v318
  %v321 = vshrl.u32 %v303, %v319
  %v322 = vor.u32 %v320, %v321
  %v323 = vsub.s32 4294967266, %v318
  %v324 = vadd.s32 %v323, 127
  %v325 = vshll.u32 %v324, 23
  %v326 = vor.u32 4788187, %v325
  %v327 = vand.u32 2147483647, %v326
  %v329 = vcvt.s32.f32 %v322
  %v330 = vmul.f32 %v329, %v327
  %v331 = vxor.u32 %v330, 2147483648
  %v332 = vsel %vm249, %v331, %v330
  %v333 = vsub.s32 4, %v309
  %v334 = vsel %vm249, %v333, %v309
  %v335 = vsel %vm248, %v37, %v332
  %v336 = vsel %vm248, 0, %v334
  %v337 = vcosq.f32.pop %v335
  %v338 = vsinq.f32.pop %v335
  %vm339 = vweird.f32 %v37
  %v340 = vadd.s32 %v336, 3
  %v341 = vand.u32 %v340, 3
  %vm342 = vcmp.lt.s32.totalorder %v341, 2
  %vm343 = vcmp.eq.s32.totalorder %v341, 0
  %v344 = vxor.u32 %v338, 2147483648
  %v345 = vsel %vm343, %v337, %v344
  %vm346 = vcmp.eq.s32.totalorder %v341, 2
  %v347 = vxor.u32 %v337, 2147483648
  %v348 = vsel %vm346, %v347, %v338
  %v349 = vsel %vm342, %v345, %v348
  %v350 = vsel %vm339, nan, %v349
  %v351 = vand.u32 2147483647, %v38
  %vm352 = vcmp.le.f32.partialorder %v351, 0.7853982
  %vm353 = vcmp.lt.s32.totalorder %v38, 0
  %v354 = vand.u32 %v38, 2139095040
  %v355 = vshrl.u32 %v354, 23
  %v356 = vsub.s32 %v355, 127
  %v357 = vand.u32 2147483647, %v38
  %v358 = vand.u32 %v357, 8388607
  %v359 = vor.u32 %v358, 8388608
  %v360 = vsub.s32 0, %v359
  %v361 = vadd.s32 %v356, 1
  %vm362 = vcmp.gt.s32.totalorder %v361, 0
  %v363 = vsel %vm362, %v361, 0
  %v364 = vshrl.u32 %v363, 5
  %v365 = vand.u32 %v363, 31
  %v366 = vsub.s32 32, %v365
  %v367 = vshrl.u32 683565275, %v366
  %v368 = vshll.u32 683565275, %v365
  %v369 = vshrl.u32 2475754826, %v366
  %v370 = vor.u32 %v368, %v369
  %v371 = vshll.u32 2475754826, %v365
  %v372 = vshrl.u32 2131351028, %v366
  %v373 = vor.u32 %v371, %v372
  %v374 = vshll.u32 2131351028, %v365
  %v375 = vshrl.u32 2102212464, %v366
  %v376 = vor.u32 %v374, %v375
  %v377 = vshll.u32 2102212464, %v365
  %v378 = vshrl.u32 920167782, %v366
  %v379 = vor.u32 %v377, %v378
  %v380 = vshll.u32 920167782, %v365
  %v381 = vshrl.u32 1326507024, %v366
  %v382 = vor.u32 %v380, %v381
  %vm383 = vcmp.lt.s32.totalorder %v364, 1
  %vm384 = vcmp.lt.s32.totalorder %v364, 2
  %vm385 = vcmp.lt.s32.totalorder %v364, 3
  %vm386 = vcmp.lt.s32.totalorder %v364, 4
  %v387 = vsel %vm383, %v367, %v370
  %v388 = vsel %vm386, %v376, 2102212464
  %v389 = vsel %vm385, %v373, %v388
  %v390 = vsel %vm384, %v387, %v389
  %v391 = vsel %vm383, %v370, %v373
  %v392 = vsel %vm386, %v379, 920167782
  %v393 = vsel %vm385, %v376, %v392
  %v394 = vsel %vm384, %v391, %v393
  %v395 = vsel %vm383, %v373, %v376
  %v396 = vsel %vm386, %v382, 1326507024
  %v397 = vsel %vm385, %v379, %v396
  %v398 = vsel %vm384, %v395, %v397
  %v399 = vshll.u32 %v359, 8
  %v400 = vmul.u32.u64.compose %v399, %v398
  %v401 = vextract.low.u32 %v400
  %v402 = vextract.high.u32 %v400
  %v403 = vmul.u32.u64.compose %v399, %v394
  %v404 = vextract.low.u32 %v403
  %v405 = vextract.high.u32 %v403
  %v406 = vmul.u32 %v399, %v390
  %v407 = vadd.s32 %v402, %v404
  %vm408 = vc.u32 %v402, %v404
  %v409 = vadd.s32 %v405, 1
  %v410 = vsel %vm408, %v409, %v405
  %v411 = vadd.s32 %v406, %v410
  %v412 = vadd.s32 %v411, 536870912
  %v413 = vshrl.u32 %v412, 30
  %v414 = vshll.u32 %v413, 30
  %v415 = vsub.s32 %v411, %v414
  %vm416 = vcmp.lt.s32.totalorder %v415, 0
  %v417 = vsub.s32 0, %v415
  %v418 = vsel %vm416, %v417, %v415
  %v419 = vclz %v418
  %v420 = vsub.s32 %v419, 2
  %vm421 = vcmp.gt.s32.totalorder 0, %v420
  %v422 = vsel %vm421, 0, %v420
  %v423 = vsub.s32 32, %v422
  %v424 = vshll.u32 %v415, %v422
  %v425 = vshrl.u32 %v407, %v423
  %v426 = vor.u32 %v424, %v425
  %v427 = vsub.s32 4294967266, %v422
  %v428 = vadd.s32 %v427, 127
  %v429 = vshll.u32 %v428, 23
  %v430 = vor.u32 4788187, %v429
  %v431 = vand.u32 2147483647, %v430
  %v433 = vcvt.s32.f32 %v426
  %v434 = vmul.f32 %v433, %v431
  %v435 = vxor.u32 %v434, 2147483648
  %v436 = vsel %vm353, %v435, %v434
  %v437 = vsub.s32 4, %v413
  %v438 = vsel %vm353, %v437, %v413
  %v439 = vsel %vm352, %v38, %v436
  %v440 = vsel %vm352, 0, %v438
  %v441 = vcosq.f32.pop %v439
  %v442 = vsinq.f32.pop %v439
  %vm443 = vweird.f32 %v38
  %v444 = vadd.s32 %v440, 3
  %v445 = vand.u32 %v444, 3
  %vm446 = vcmp.lt.s32.totalorder %v445, 2
  %vm447 = vcmp.eq.s32.totalorder %v445, 0
  %v448 = vxor.u32 %v442, 2147483648
  %v449 = vsel %vm447, %v441, %v448
  %vm450 = vcmp.eq.s32.totalorder %v445, 2
  %v451 = vxor.u32 %v441, 2147483648
  %v452 = vsel %vm450, %v451, %v442
  %v453 = vsel %vm446, %v449, %v452
  %v454 = vsel %vm443, nan, %v453
  %455 = vst [vmem:[%s2] sm:$0xff] %v142
  %456 = vst [vmem:[%s2 + $0x8] sm:$0xff] %v246
  %457 = vst [vmem:[%s2 + $0x10] sm:$0x3] %v350
  %458 = vst [vmem:[%s2 + $0x18] sm:$0x3] %v454
  %v459 = vand.u32 2147483647, %v35
  %vm460 = vcmp.le.f32.partialorder %v459, 0.7853982
  %vm461 = vcmp.lt.s32.totalorder %v35, 0
  %v462 = vand.u32 %v35, 2139095040
  %v463 = vshrl.u32 %v462, 23
  %v464 = vsub.s32 %v463, 127
  %v465 = vand.u32 2147483647, %v35
  %v466 = vand.u32 %v465, 8388607
  %v467 = vor.u32 %v466, 8388608
  %v468 = vsub.s32 0, %v467
  %v469 = vadd.s32 %v464, 1
  %vm470 = vcmp.gt.s32.totalorder %v469, 0
  %v471 = vsel %vm470, %v469, 0
  %v472 = vshrl.u32 %v471, 5
  %v473 = vand.u32 %v471, 31
  %v474 = vsub.s32 32, %v473
  %v475 = vshrl.u32 683565275, %v474
  %v476 = vshll.u32 683565275, %v473
  %v477 = vshrl.u32 2475754826, %v474
  %v478 = vor.u32 %v476, %v477
  %v479 = vshll.u32 2475754826, %v473
  %v480 = vshrl.u32 2131351028, %v474
  %v481 = vor.u32 %v479, %v480
  %v482 = vshll.u32 2131351028, %v473
  %v483 = vshrl.u32 2102212464, %v474
  %v484 = vor.u32 %v482, %v483
  %v485 = vshll.u32 2102212464, %v473
  %v486 = vshrl.u32 920167782, %v474
  %v487 = vor.u32 %v485, %v486
  %v488 = vshll.u32 920167782, %v473
  %v489 = vshrl.u32 1326507024, %v474
  %v490 = vor.u32 %v488, %v489
  %vm491 = vcmp.lt.s32.totalorder %v472, 1
  %vm492 = vcmp.lt.s32.totalorder %v472, 2
  %vm493 = vcmp.lt.s32.totalorder %v472, 3
  %vm494 = vcmp.lt.s32.totalorder %v472, 4
  %v495 = vsel %vm491, %v475, %v478
  %v496 = vsel %vm494, %v484, 2102212464
  %v497 = vsel %vm493, %v481, %v496
  %v498 = vsel %vm492, %v495, %v497
  %v499 = vsel %vm491, %v478, %v481
  %v500 = vsel %vm494, %v487, 920167782
  %v501 = vsel %vm493, %v484, %v500
  %v502 = vsel %vm492, %v499, %v501
  %v503 = vsel %vm491, %v481, %v484
  %v504 = vsel %vm494, %v490, 1326507024
  %v505 = vsel %vm493, %v487, %v504
  %v506 = vsel %vm492, %v503, %v505
  %v507 = vshll.u32 %v467, 8
  %v508 = vmul.u32.u64.compose %v507, %v506
  %v509 = vextract.low.u32 %v508
  %v510 = vextract.high.u32 %v508
  %v511 = vmul.u32.u64.compose %v507, %v502
  %v512 = vextract.low.u32 %v511
  %v513 = vextract.high.u32 %v511
  %v514 = vmul.u32 %v507, %v498
  %v515 = vadd.s32 %v510, %v512
  %vm516 = vc.u32 %v510, %v512
  %v517 = vadd.s32 %v513, 1
  %v518 = vsel %vm516, %v517, %v513
  %v519 = vadd.s32 %v514, %v518
  %v520 = vadd.s32 %v519, 536870912
  %v521 = vshrl.u32 %v520, 30
  %v522 = vshll.u32 %v521, 30
  %v523 = vsub.s32 %v519, %v522
  %vm524 = vcmp.lt.s32.totalorder %v523, 0
  %v525 = vsub.s32 0, %v523
  %v526 = vsel %vm524, %v525, %v523
  %v527 = vclz %v526
  %v528 = vsub.s32 %v527, 2
  %vm529 = vcmp.gt.s32.totalorder 0, %v528
  %v530 = vsel %vm529, 0, %v528
  %v531 = vsub.s32 32, %v530
  %v532 = vshll.u32 %v523, %v530
  %v533 = vshrl.u32 %v515, %v531
  %v534 = vor.u32 %v532, %v533
  %v535 = vsub.s32 4294967266, %v530
  %v536 = vadd.s32 %v535, 127
  %v537 = vshll.u32 %v536, 23
  %v538 = vor.u32 4788187, %v537
  %v539 = vand.u32 2147483647, %v538
  %v541 = vcvt.s32.f32 %v534
  %v542 = vmul.f32 %v541, %v539
  %v543 = vxor.u32 %v542, 2147483648
  %v544 = vsel %vm461, %v543, %v542
  %v545 = vsub.s32 4, %v521
  %v546 = vsel %vm461, %v545, %v521
  %v547 = vsel %vm460, %v35, %v544
  %v548 = vsel %vm460, 0, %v546
  %v549 = vcosq.f32.pop %v547
  %v550 = vsinq.f32.pop %v547
  %vm551 = vweird.f32 %v35
  %v552 = vand.u32 %v548, 3
  %vm553 = vcmp.lt.s32.totalorder %v552, 2
  %vm554 = vcmp.eq.s32.totalorder %v552, 0
  %v555 = vxor.u32 %v550, 2147483648
  %v556 = vsel %vm554, %v549, %v555
  %vm557 = vcmp.eq.s32.totalorder %v552, 2
  %v558 = vxor.u32 %v549, 2147483648
  %v559 = vsel %vm557, %v558, %v550
  %v560 = vsel %vm553, %v556, %v559
  %v561 = vsel %vm551, nan, %v560
  %v562 = vand.u32 2147483647, %v36
  %vm563 = vcmp.le.f32.partialorder %v562, 0.7853982
  %vm564 = vcmp.lt.s32.totalorder %v36, 0
  %v565 = vand.u32 %v36, 2139095040
  %v566 = vshrl.u32 %v565, 23
  %v567 = vsub.s32 %v566, 127
  %v568 = vand.u32 2147483647, %v36
  %v569 = vand.u32 %v568, 8388607
  %v570 = vor.u32 %v569, 8388608
  %v571 = vsub.s32 0, %v570
  %v572 = vadd.s32 %v567, 1
  %vm573 = vcmp.gt.s32.totalorder %v572, 0
  %v574 = vsel %vm573, %v572, 0
  %v575 = vshrl.u32 %v574, 5
  %v576 = vand.u32 %v574, 31
  %v577 = vsub.s32 32, %v576
  %v578 = vshrl.u32 683565275, %v577
  %v579 = vshll.u32 683565275, %v576
  %v580 = vshrl.u32 2475754826, %v577
  %v581 = vor.u32 %v579, %v580
  %v582 = vshll.u32 2475754826, %v576
  %v583 = vshrl.u32 2131351028, %v577
  %v584 = vor.u32 %v582, %v583
  %v585 = vshll.u32 2131351028, %v576
  %v586 = vshrl.u32 2102212464, %v577
  %v587 = vor.u32 %v585, %v586
  %v588 = vshll.u32 2102212464, %v576
  %v589 = vshrl.u32 920167782, %v577
  %v590 = vor.u32 %v588, %v589
  %v591 = vshll.u32 920167782, %v576
  %v592 = vshrl.u32 1326507024, %v577
  %v593 = vor.u32 %v591, %v592
  %vm594 = vcmp.lt.s32.totalorder %v575, 1
  %vm595 = vcmp.lt.s32.totalorder %v575, 2
  %vm596 = vcmp.lt.s32.totalorder %v575, 3
  %vm597 = vcmp.lt.s32.totalorder %v575, 4
  %v598 = vsel %vm594, %v578, %v581
  %v599 = vsel %vm597, %v587, 2102212464
  %v600 = vsel %vm596, %v584, %v599
  %v601 = vsel %vm595, %v598, %v600
  %v602 = vsel %vm594, %v581, %v584
  %v603 = vsel %vm597, %v590, 920167782
  %v604 = vsel %vm596, %v587, %v603
  %v605 = vsel %vm595, %v602, %v604
  %v606 = vsel %vm594, %v584, %v587
  %v607 = vsel %vm597, %v593, 1326507024
  %v608 = vsel %vm596, %v590, %v607
  %v609 = vsel %vm595, %v606, %v608
  %v610 = vshll.u32 %v570, 8
  %v611 = vmul.u32.u64.compose %v610, %v609
  %v612 = vextract.low.u32 %v611
  %v613 = vextract.high.u32 %v611
  %v614 = vmul.u32.u64.compose %v610, %v605
  %v615 = vextract.low.u32 %v614
  %v616 = vextract.high.u32 %v614
  %v617 = vmul.u32 %v610, %v601
  %v618 = vadd.s32 %v613, %v615
  %vm619 = vc.u32 %v613, %v615
  %v620 = vadd.s32 %v616, 1
  %v621 = vsel %vm619, %v620, %v616
  %v622 = vadd.s32 %v617, %v621
  %v623 = vadd.s32 %v622, 536870912
  %v624 = vshrl.u32 %v623, 30
  %v625 = vshll.u32 %v624, 30
  %v626 = vsub.s32 %v622, %v625
  %vm627 = vcmp.lt.s32.totalorder %v626, 0
  %v628 = vsub.s32 0, %v626
  %v629 = vsel %vm627, %v628, %v626
  %v630 = vclz %v629
  %v631 = vsub.s32 %v630, 2
  %vm632 = vcmp.gt.s32.totalorder 0, %v631
  %v633 = vsel %vm632, 0, %v631
  %v634 = vsub.s32 32, %v633
  %v635 = vshll.u32 %v626, %v633
  %v636 = vshrl.u32 %v618, %v634
  %v637 = vor.u32 %v635, %v636
  %v638 = vsub.s32 4294967266, %v633
  %v639 = vadd.s32 %v638, 127
  %v640 = vshll.u32 %v639, 23
  %v641 = vor.u32 4788187, %v640
  %v642 = vand.u32 2147483647, %v641
  %v644 = vcvt.s32.f32 %v637
  %v645 = vmul.f32 %v644, %v642
  %v646 = vxor.u32 %v645, 2147483648
  %v647 = vsel %vm564, %v646, %v645
  %v648 = vsub.s32 4, %v624
  %v649 = vsel %vm564, %v648, %v624
  %v650 = vsel %vm563, %v36, %v647
  %v651 = vsel %vm563, 0, %v649
  %v652 = vcosq.f32.pop %v650
  %v653 = vsinq.f32.pop %v650
  %vm654 = vweird.f32 %v36
  %v655 = vand.u32 %v651, 3
  %vm656 = vcmp.lt.s32.totalorder %v655, 2
  %vm657 = vcmp.eq.s32.totalorder %v655, 0
  %v658 = vxor.u32 %v653, 2147483648
  %v659 = vsel %vm657, %v652, %v658
  %vm660 = vcmp.eq.s32.totalorder %v655, 2
  %v661 = vxor.u32 %v652, 2147483648
  %v662 = vsel %vm660, %v661, %v653
  %v663 = vsel %vm656, %v659, %v662
  %v664 = vsel %vm654, nan, %v663
  %v665 = vand.u32 2147483647, %v37
  %vm666 = vcmp.le.f32.partialorder %v665, 0.7853982
  %vm667 = vcmp.lt.s32.totalorder %v37, 0
  %v668 = vand.u32 %v37, 2139095040
  %v669 = vshrl.u32 %v668, 23
  %v670 = vsub.s32 %v669, 127
  %v671 = vand.u32 2147483647, %v37
  %v672 = vand.u32 %v671, 8388607
  %v673 = vor.u32 %v672, 8388608
  %v674 = vsub.s32 0, %v673
  %v675 = vadd.s32 %v670, 1
  %vm676 = vcmp.gt.s32.totalorder %v675, 0
  %v677 = vsel %vm676, %v675, 0
  %v678 = vshrl.u32 %v677, 5
  %v679 = vand.u32 %v677, 31
  %v680 = vsub.s32 32, %v679
  %v681 = vshrl.u32 683565275, %v680
  %v682 = vshll.u32 683565275, %v679
  %v683 = vshrl.u32 2475754826, %v680
  %v684 = vor.u32 %v682, %v683
  %v685 = vshll.u32 2475754826, %v679
  %v686 = vshrl.u32 2131351028, %v680
  %v687 = vor.u32 %v685, %v686
  %v688 = vshll.u32 2131351028, %v679
  %v689 = vshrl.u32 2102212464, %v680
  %v690 = vor.u32 %v688, %v689
  %v691 = vshll.u32 2102212464, %v679
  %v692 = vshrl.u32 920167782, %v680
  %v693 = vor.u32 %v691, %v692
  %v694 = vshll.u32 920167782, %v679
  %v695 = vshrl.u32 1326507024, %v680
  %v696 = vor.u32 %v694, %v695
  %vm697 = vcmp.lt.s32.totalorder %v678, 1
  %vm698 = vcmp.lt.s32.totalorder %v678, 2
  %vm699 = vcmp.lt.s32.totalorder %v678, 3
  %vm700 = vcmp.lt.s32.totalorder %v678, 4
  %v701 = vsel %vm697, %v681, %v684
  %v702 = vsel %vm700, %v690, 2102212464
  %v703 = vsel %vm699, %v687, %v702
  %v704 = vsel %vm698, %v701, %v703
  %v705 = vsel %vm697, %v684, %v687
  %v706 = vsel %vm700, %v693, 920167782
  %v707 = vsel %vm699, %v690, %v706
  %v708 = vsel %vm698, %v705, %v707
  %v709 = vsel %vm697, %v687, %v690
  %v710 = vsel %vm700, %v696, 1326507024
  %v711 = vsel %vm699, %v693, %v710
  %v712 = vsel %vm698, %v709, %v711
  %v713 = vshll.u32 %v673, 8
  %v714 = vmul.u32.u64.compose %v713, %v712
  %v715 = vextract.low.u32 %v714
  %v716 = vextract.high.u32 %v714
  %v717 = vmul.u32.u64.compose %v713, %v708
  %v718 = vextract.low.u32 %v717
  %v719 = vextract.high.u32 %v717
  %v720 = vmul.u32 %v713, %v704
  %v721 = vadd.s32 %v716, %v718
  %vm722 = vc.u32 %v716, %v718
  %v723 = vadd.s32 %v719, 1
  %v724 = vsel %vm722, %v723, %v719
  %v725 = vadd.s32 %v720, %v724
  %v726 = vadd.s32 %v725, 536870912
  %v727 = vshrl.u32 %v726, 30
  %v728 = vshll.u32 %v727, 30
  %v729 = vsub.s32 %v725, %v728
  %vm730 = vcmp.lt.s32.totalorder %v729, 0
  %v731 = vsub.s32 0, %v729
  %v732 = vsel %vm730, %v731, %v729
  %v733 = vclz %v732
  %v734 = vsub.s32 %v733, 2
  %vm735 = vcmp.gt.s32.totalorder 0, %v734
  %v736 = vsel %vm735, 0, %v734
  %v737 = vsub.s32 32, %v736
  %v738 = vshll.u32 %v729, %v736
  %v739 = vshrl.u32 %v721, %v737
  %v740 = vor.u32 %v738, %v739
  %v741 = vsub.s32 4294967266, %v736
  %v742 = vadd.s32 %v741, 127
  %v743 = vshll.u32 %v742, 23
  %v744 = vor.u32 4788187, %v743
  %v745 = vand.u32 2147483647, %v744
  %v747 = vcvt.s32.f32 %v740
  %v748 = vmul.f32 %v747, %v745
  %v749 = vxor.u32 %v748, 2147483648
  %v750 = vsel %vm667, %v749, %v748
  %v751 = vsub.s32 4, %v727
  %v752 = vsel %vm667, %v751, %v727
  %v753 = vsel %vm666, %v37, %v750
  %v754 = vsel %vm666, 0, %v752
  %v755 = vcosq.f32.pop %v753
  %v756 = vsinq.f32.pop %v753
  %vm757 = vweird.f32 %v37
  %v758 = vand.u32 %v754, 3
  %vm759 = vcmp.lt.s32.totalorder %v758, 2
  %vm760 = vcmp.eq.s32.totalorder %v758, 0
  %v761 = vxor.u32 %v756, 2147483648
  %v762 = vsel %vm760, %v755, %v761
  %vm763 = vcmp.eq.s32.totalorder %v758, 2
  %v764 = vxor.u32 %v755, 2147483648
  %v765 = vsel %vm763, %v764, %v756
  %v766 = vsel %vm759, %v762, %v765
  %v767 = vsel %vm757, nan, %v766
  %v768 = vand.u32 2147483647, %v38
  %vm769 = vcmp.le.f32.partialorder %v768, 0.7853982
  %vm770 = vcmp.lt.s32.totalorder %v38, 0
  %v771 = vand.u32 %v38, 2139095040
  %v772 = vshrl.u32 %v771, 23
  %v773 = vsub.s32 %v772, 127
  %v774 = vand.u32 2147483647, %v38
  %v775 = vand.u32 %v774, 8388607
  %v776 = vor.u32 %v775, 8388608
  %v777 = vsub.s32 0, %v776
  %v778 = vadd.s32 %v773, 1
  %vm779 = vcmp.gt.s32.totalorder %v778, 0
  %v780 = vsel %vm779, %v778, 0
  %v781 = vshrl.u32 %v780, 5
  %v782 = vand.u32 %v780, 31
  %v783 = vsub.s32 32, %v782
  %v784 = vshrl.u32 683565275, %v783
  %v785 = vshll.u32 683565275, %v782
  %v786 = vshrl.u32 2475754826, %v783
  %v787 = vor.u32 %v785, %v786
  %v788 = vshll.u32 2475754826, %v782
  %v789 = vshrl.u32 2131351028, %v783
  %v790 = vor.u32 %v788, %v789
  %v791 = vshll.u32 2131351028, %v782
  %v792 = vshrl.u32 2102212464, %v783
  %v793 = vor.u32 %v791, %v792
  %v794 = vshll.u32 2102212464, %v782
  %v795 = vshrl.u32 920167782, %v783
  %v796 = vor.u32 %v794, %v795
  %v797 = vshll.u32 920167782, %v782
  %v798 = vshrl.u32 1326507024, %v783
  %v799 = vor.u32 %v797, %v798
  %vm800 = vcmp.lt.s32.totalorder %v781, 1
  %vm801 = vcmp.lt.s32.totalorder %v781, 2
  %vm802 = vcmp.lt.s32.totalorder %v781, 3
  %vm803 = vcmp.lt.s32.totalorder %v781, 4
  %v804 = vsel %vm800, %v784, %v787
  %v805 = vsel %vm803, %v793, 2102212464
  %v806 = vsel %vm802, %v790, %v805
  %v807 = vsel %vm801, %v804, %v806
  %v808 = vsel %vm800, %v787, %v790
  %v809 = vsel %vm803, %v796, 920167782
  %v810 = vsel %vm802, %v793, %v809
  %v811 = vsel %vm801, %v808, %v810
  %v812 = vsel %vm800, %v790, %v793
  %v813 = vsel %vm803, %v799, 1326507024
  %v814 = vsel %vm802, %v796, %v813
  %v815 = vsel %vm801, %v812, %v814
  %v816 = vshll.u32 %v776, 8
  %v817 = vmul.u32.u64.compose %v816, %v815
  %v818 = vextract.low.u32 %v817
  %v819 = vextract.high.u32 %v817
  %v820 = vmul.u32.u64.compose %v816, %v811
  %v821 = vextract.low.u32 %v820
  %v822 = vextract.high.u32 %v820
  %v823 = vmul.u32 %v816, %v807
  %v824 = vadd.s32 %v819, %v821
  %vm825 = vc.u32 %v819, %v821
  %v826 = vadd.s32 %v822, 1
  %v827 = vsel %vm825, %v826, %v822
  %v828 = vadd.s32 %v823, %v827
  %v829 = vadd.s32 %v828, 536870912
  %v830 = vshrl.u32 %v829, 30
  %v831 = vshll.u32 %v830, 30
  %v832 = vsub.s32 %v828, %v831
  %vm833 = vcmp.lt.s32.totalorder %v832, 0
  %v834 = vsub.s32 0, %v832
  %v835 = vsel %vm833, %v834, %v832
  %v836 = vclz %v835
  %v837 = vsub.s32 %v836, 2
  %vm838 = vcmp.gt.s32.totalorder 0, %v837
  %v839 = vsel %vm838, 0, %v837
  %v840 = vsub.s32 32, %v839
  %v841 = vshll.u32 %v832, %v839
  %v842 = vshrl.u32 %v824, %v840
  %v843 = vor.u32 %v841, %v842
  %v844 = vsub.s32 4294967266, %v839
  %v845 = vadd.s32 %v844, 127
  %v846 = vshll.u32 %v845, 23
  %v847 = vor.u32 4788187, %v846
  %v848 = vand.u32 2147483647, %v847
  %v850 = vcvt.s32.f32 %v843
  %v851 = vmul.f32 %v850, %v848
  %v852 = vxor.u32 %v851, 2147483648
  %v853 = vsel %vm770, %v852, %v851
  %v854 = vsub.s32 4, %v830
  %v855 = vsel %vm770, %v854, %v830
  %v856 = vsel %vm769, %v38, %v853
  %v857 = vsel %vm769, 0, %v855
  %v858 = vcosq.f32.pop %v856
  %v859 = vsinq.f32.pop %v856
  %vm860 = vweird.f32 %v38
  %v861 = vand.u32 %v857, 3
  %vm862 = vcmp.lt.s32.totalorder %v861, 2
  %vm863 = vcmp.eq.s32.totalorder %v861, 0
  %v864 = vxor.u32 %v859, 2147483648
  %v865 = vsel %vm863, %v858, %v864
  %vm866 = vcmp.eq.s32.totalorder %v861, 2
  %v867 = vxor.u32 %v858, 2147483648
  %v868 = vsel %vm866, %v867, %v859
  %v869 = vsel %vm862, %v865, %v868
  %v870 = vsel %vm860, nan, %v869
  %s871 = scalar_lea.vmem %s2, 32
  %872 = vst [vmem:[%s871] sm:$0xff] %v561
  %873 = vst [vmem:[%s871 + $0x8] sm:$0xff] %v664
  %874 = vst [vmem:[%s871 + $0x10] sm:$0x3] %v767
  %875 = vst [vmem:[%s871 + $0x18] sm:$0x3] %v870
  // Predicated region
  $region10: #{tpu_custom_call.1} parent=0 // pred_check
    _
  $region11: #{tpu_custom_call.1} parent=0 // pred_check_branch
    %877 = sbr.rel (0) target = $region13
  $region12: #{tpu_custom_call.1} parent=0 // pred_region
    _
  $region13: #{tpu_custom_call.1} parent=0 // pred_fallthru
    _
  // Predicated region
  $region14: #{tpu_custom_call.1} parent=0 // pred_check
    _
  $region15: #{tpu_custom_call.1} parent=0 // pred_check_branch
    %879 = sbr.rel (0) target = $region17
  $region16: #{tpu_custom_call.1} parent=0 // pred_region
    _
  $region17: #{tpu_custom_call.1} parent=0 // pred_fallthru
    _

</llo_original>
